<compile_context>
chip_gen: v7x
topology: tpu7x:2x2x1
jax: 0.10.0
libtpu: 0.0.40
codegen_flags: <defaults>
</compile_context>

<pallas_src>
import functools

import jax
import jax.numpy as jnp
from jax.experimental import pallas as pl
from jax.experimental.pallas import tpu as pltpu

LANES = 128
SUBLANES = 8
MAX_TILE_ROWS = 8192          # (8192,128) f32 = 4 MiB per input tile
NUM_CORES = 2                 # v7x has 2 TCs; harmless serial split on v5e/v6e
VMEM_LIMIT_BYTES = 40 * 1024 * 1024


def _precision_kernel(pred_ref, tgt_ref, tp_ref, pp_ref, *, nrows):
    c = pl.program_id(0)                 # core (parallel) axis
    i = pl.program_id(1)                 # per-core row-tile (arbitrary) axis
    tile_rows = pred_ref.shape[0]

    @pl.when(i == 0)
    def _():
        tp_ref[...] = jnp.zeros_like(tp_ref)
        pp_ref[...] = jnp.zeros_like(pp_ref)

    g = c * pl.num_programs(1) + i       # logical (unclamped) row-tile index
    row0 = g * tile_rows

    pred = pred_ref[...]                 # native dtype; no casts on the stream
    tgt = tgt_ref[...]

    def accumulate(pos):
        # TP: positive prediction AND target == 1; denominator: all positives.
        tp = ((tgt == 1) & pos).astype(jnp.float32)
        pp = pos.astype(jnp.float32)
        # Per-vreg partial sums: pure VALU add tree, no per-step XLU reduce.
        tp_ref[...] += tp.reshape(-1, SUBLANES, LANES).sum(axis=0)
        pp_ref[...] += pp.reshape(-1, SUBLANES, LANES).sum(axis=0)

    interior = row0 + tile_rows <= nrows

    @pl.when(interior)                   # fast path: no mask work at all
    def _():
        accumulate(pred > 0)             # sigmoid(x) > 0.5  <=>  x > 0

    @pl.when(jnp.logical_not(interior))  # boundary / fully-out-of-range tiles
    def _():
        # Loop-invariant base iota vs a scalar: one compare + one and.
        row_iota = jax.lax.broadcasted_iota(jnp.int32, pred.shape, 0)
        valid = row_iota < (nrows - row0)
        accumulate((pred > 0) & valid)


def precision(predicted, target):
    """Binary precision of (sigmoid(predicted) > 0.5) vs target (scalar f32)."""
    pred_flat = jnp.ravel(predicted)
    tgt_flat = jnp.ravel(target)
    n = pred_flat.shape[0]

    # Pad only to the next lane multiple (needed for the free (rows,128)
    # reshape). Pad value 0 is neutral: logit 0 -> sigmoid 0.5 -> not > 0.5.
    n_pad = ((n + LANES - 1) // LANES) * LANES
    if n_pad != n:
        # TODO(synk): a 1-D BlockSpec + flat-element-id mask would avoid this
        # full-copy pad for lane-misaligned sizes.
        pred_flat = jnp.pad(pred_flat, (0, n_pad - n))
        tgt_flat = jnp.pad(tgt_flat, (0, n_pad - n))

    rows = n_pad // LANES
    pred2d = pred_flat.reshape(rows, LANES)
    tgt2d = tgt_flat.reshape(rows, LANES)

    tile_rows = min(MAX_TILE_ROWS,
                    ((rows + SUBLANES - 1) // SUBLANES) * SUBLANES)
    total_tiles = pl.cdiv(rows, tile_rows)
    steps_per_core = pl.cdiv(total_tiles, NUM_CORES)

    def in_map(c, i):
        # Clamp so the (at most NUM_CORES-1) grid steps past the real tile
        # range just re-read the last tile; their contribution is masked to 0.
        return (jnp.minimum(c * steps_per_core + i, total_tiles - 1), 0)

    # 3-deep input pipelining on long grids (sweep knob; default 2 otherwise).
    if steps_per_core >= 3:
        in_spec = pl.BlockSpec((tile_rows, LANES), in_map,
                               pipeline_mode=pl.Buffered(3))
    else:
        in_spec = pl.BlockSpec((tile_rows, LANES), in_map)

    # One (8,128) per-lane/sublane partial-count block per core, per output.
    out_spec = pl.BlockSpec((SUBLANES, LANES), lambda c, i: (c, 0))

    kernel = functools.partial(_precision_kernel, nrows=rows)

    tp_parts, pp_parts = pl.pallas_call(
        kernel,
        out_shape=(
            jax.ShapeDtypeStruct((NUM_CORES * SUBLANES, LANES), jnp.float32),
            jax.ShapeDtypeStruct((NUM_CORES * SUBLANES, LANES), jnp.float32),
        ),
        grid=(NUM_CORES, steps_per_core),
        in_specs=[in_spec, in_spec],
        out_specs=(out_spec, out_spec),
        compiler_params=pltpu.CompilerParams(
            dimension_semantics=("parallel", "arbitrary"),
            vmem_limit_bytes=VMEM_LIMIT_BYTES,
        ),
    )(pred2d, tgt2d)

    # Tiny final collapse (NUM_CORES*8*128 elements each) in plain XLA.
    tp = jnp.sum(tp_parts)
    pp = jnp.sum(pp_parts)
    # torchmetrics returns 0 when there are no positive predictions.
    return jnp.where(pp > 0.0, tp / jnp.maximum(pp, 1.0), 0.0)


if __name__ == "__main__":
    key = jax.random.PRNGKey(0)
    k1, k2 = jax.random.split(key)

    # small NCHW-like shapes: batch=2, channels=4, spatial=16x16
    predicted = jax.random.normal(k1, (2, 4, 16, 16), dtype=jnp.float32)
    target = (jax.random.uniform(k2, (2, 4, 16, 16)) > 0.5).astype(jnp.float32)

    loss = precision(predicted, target)
    jax.block_until_ready(loss)

    # pure-JAX reference (with the literal sigmoid, as in the module)
    p = jax.nn.sigmoid(predicted)
    pos = (p > 0.5).astype(jnp.float32)
    tp = jnp.sum(pos * target)
    pp = jnp.sum(pos)
    ref = jnp.where(pp > 0, tp / jnp.maximum(pp, 1.0), 0.0)
    assert jnp.allclose(loss, ref, atol=1e-6), (loss, ref)

    print("KERNEL_OK")
</pallas_src>

<mosaic_0001>
module attributes {stable_mosaic.version = 11 : i64} {
  func.func @_precision_kernel(%arg0: i32, %arg1: i32, %arg2: memref<16x128xf32, #tpu.memory_space<vmem>>, %arg3: memref<16x128xf32, #tpu.memory_space<vmem>>, %arg4: memref<8x128xf32, #tpu.memory_space<vmem>>, %arg5: memref<8x128xf32, #tpu.memory_space<vmem>>) attributes {dimension_semantics = [#tpu.dimension_semantics<parallel>, #tpu.dimension_semantics<arbitrary>], iteration_bounds = array<i64: 2, 1>, scalar_prefetch = 0 : i64, scratch_operands = 0 : i64, tpu.core_type = #tpu.core_type<tc>, window_params = [{transform_indices = @transform_0, window_bounds = array<i64: 16, 128>}, {transform_indices = @transform_1, window_bounds = array<i64: 16, 128>}, {transform_indices = @transform_2, window_bounds = array<i64: 8, 128>}, {transform_indices = @transform_3, window_bounds = array<i64: 8, 128>}]} {
    %c0_i32 = arith.constant 0 : i32
    %0 = arith.cmpi eq, %arg1, %c0_i32 : i32
    %1 = arith.extui %0 : i1 to i32
    %c0_i32_0 = arith.constant 0 : i32
    %2 = arith.cmpi ne, %1, %c0_i32_0 : i32
    scf.if %2 {
      %cst = arith.constant 0.000000e+00 : f32
      %15 = vector.broadcast %cst : f32 to vector<8x128xf32>
      %c0_8 = arith.constant 0 : index
      %c0_9 = arith.constant 0 : index
      %16 = vector.load %arg4[%c0_8, %c0_9] : memref<8x128xf32, #tpu.memory_space<vmem>>, vector<8x128xf32>
      tpu.vector_store %arg4[%c0_8, %c0_9], %15 {strides = array<i32>} : memref<8x128xf32, #tpu.memory_space<vmem>>, vector<8x128xf32>,
      %cst_10 = arith.constant 0.000000e+00 : f32
      %17 = vector.broadcast %cst_10 : f32 to vector<8x128xf32>
      %c0_11 = arith.constant 0 : index
      %c0_12 = arith.constant 0 : index
      %18 = vector.load %arg5[%c0_11, %c0_12] : memref<8x128xf32, #tpu.memory_space<vmem>>, vector<8x128xf32>
      tpu.vector_store %arg5[%c0_11, %c0_12], %17 {strides = array<i32>} : memref<8x128xf32, #tpu.memory_space<vmem>>, vector<8x128xf32>,
    } else {
    }
    %c1_i32 = arith.constant 1 : i32
    %3 = arith.muli %arg0, %c1_i32 : i32
    %4 = arith.addi %3, %arg1 : i32
    %c16_i32 = arith.constant 16 : i32
    %5 = arith.muli %4, %c16_i32 : i32
    %c0 = arith.constant 0 : index
    %c0_1 = arith.constant 0 : index
    %6 = vector.load %arg2[%c0, %c0_1] : memref<16x128xf32, #tpu.memory_space<vmem>>, vector<16x128xf32>
    %c0_2 = arith.constant 0 : index
    %c0_3 = arith.constant 0 : index
    %7 = vector.load %arg3[%c0_2, %c0_3] : memref<16x128xf32, #tpu.memory_space<vmem>>, vector<16x128xf32>
    %c16_i32_4 = arith.constant 16 : i32
    %8 = arith.addi %5, %c16_i32_4 : i32
    %c16_i32_5 = arith.constant 16 : i32
    %9 = arith.cmpi sle, %8, %c16_i32_5 : i32
    %10 = arith.extui %9 : i1 to i32
    %c0_i32_6 = arith.constant 0 : i32
    %11 = arith.cmpi ne, %10, %c0_i32_6 : i32
    scf.if %11 {
      %cst = arith.constant 0.000000e+00 : f32
      %15 = vector.broadcast %cst : f32 to vector<16x128xf32>
      %16 = arith.cmpf ogt, %6, %15 : vector<16x128xf32>
      %cst_8 = arith.constant 1.000000e+00 : f32
      %17 = vector.broadcast %cst_8 : f32 to vector<16x128xf32>
      %18 = arith.cmpf oeq, %7, %17 : vector<16x128xf32>
      %19 = arith.andi %18, %16 : vector<16x128xi1>
      %20 = arith.extui %19 : vector<16x128xi1> to vector<16x128xi32>
      %21 = arith.sitofp %20 : vector<16x128xi32> to vector<16x128xf32>
      %22 = arith.extui %16 : vector<16x128xi1> to vector<16x128xi32>
      %23 = arith.sitofp %22 : vector<16x128xi32> to vector<16x128xf32>
      %c0_9 = arith.constant 0 : index
      %c0_10 = arith.constant 0 : index
      %24 = vector.load %arg4[%c0_9, %c0_10] : memref<8x128xf32, #tpu.memory_space<vmem>>, vector<8x128xf32>
      %25 = vector.shape_cast %21 : vector<16x128xf32> to vector<2x8x128xf32>
      %cst_11 = arith.constant dense<0.000000e+00> : vector<8x128xf32>
      %26 = vector.multi_reduction <add>, %25, %cst_11 [0] : vector<2x8x128xf32> to vector<8x128xf32>
      %27 = arith.addf %24, %26 : vector<8x128xf32>
      %c0_12 = arith.constant 0 : index
      %c0_13 = arith.constant 0 : index
      %28 = vector.load %arg4[%c0_12, %c0_13] : memref<8x128xf32, #tpu.memory_space<vmem>>, vector<8x128xf32>
      tpu.vector_store %arg4[%c0_12, %c0_13], %27 {strides = array<i32>} : memref<8x128xf32, #tpu.memory_space<vmem>>, vector<8x128xf32>,
      %c0_14 = arith.constant 0 : index
      %c0_15 = arith.constant 0 : index
      %29 = vector.load %arg5[%c0_14, %c0_15] : memref<8x128xf32, #tpu.memory_space<vmem>>, vector<8x128xf32>
      %30 = vector.shape_cast %23 : vector<16x128xf32> to vector<2x8x128xf32>
      %cst_16 = arith.constant dense<0.000000e+00> : vector<8x128xf32>
      %31 = vector.multi_reduction <add>, %30, %cst_16 [0] : vector<2x8x128xf32> to vector<8x128xf32>
      %32 = arith.addf %29, %31 : vector<8x128xf32>
      %c0_17 = arith.constant 0 : index
      %c0_18 = arith.constant 0 : index
      %33 = vector.load %arg5[%c0_17, %c0_18] : memref<8x128xf32, #tpu.memory_space<vmem>>, vector<8x128xf32>
      tpu.vector_store %arg5[%c0_17, %c0_18], %32 {strides = array<i32>} : memref<8x128xf32, #tpu.memory_space<vmem>>, vector<8x128xf32>,
    } else {
    }
    %true = arith.constant true
    %12 = arith.xori %9, %true : i1
    %13 = arith.extui %12 : i1 to i32
    %c0_i32_7 = arith.constant 0 : i32
    %14 = arith.cmpi ne, %13, %c0_i32_7 : i32
    scf.if %14 {
      %15 = tpu.iota {dimensions = array<i32: 0>} : vector<16x128xi32>
      %c16_i32_8 = arith.constant 16 : i32
      %16 = arith.subi %c16_i32_8, %5 : i32
      %17 = vector.broadcast %16 : i32 to vector<16x128xi32>
      %18 = arith.cmpi slt, %15, %17 : vector<16x128xi32>
      %cst = arith.constant 0.000000e+00 : f32
      %19 = vector.broadcast %cst : f32 to vector<16x128xf32>
      %20 = arith.cmpf ogt, %6, %19 : vector<16x128xf32>
      %21 = arith.andi %20, %18 : vector<16x128xi1>
      %cst_9 = arith.constant 1.000000e+00 : f32
      %22 = vector.broadcast %cst_9 : f32 to vector<16x128xf32>
      %23 = arith.cmpf oeq, %7, %22 : vector<16x128xf32>
      %24 = arith.andi %23, %21 : vector<16x128xi1>
      %25 = arith.extui %24 : vector<16x128xi1> to vector<16x128xi32>
      %26 = arith.sitofp %25 : vector<16x128xi32> to vector<16x128xf32>
      %27 = arith.extui %21 : vector<16x128xi1> to vector<16x128xi32>
      %28 = arith.sitofp %27 : vector<16x128xi32> to vector<16x128xf32>
      %c0_10 = arith.constant 0 : index
      %c0_11 = arith.constant 0 : index
      %29 = vector.load %arg4[%c0_10, %c0_11] : memref<8x128xf32, #tpu.memory_space<vmem>>, vector<8x128xf32>
      %30 = vector.shape_cast %26 : vector<16x128xf32> to vector<2x8x128xf32>
      %cst_12 = arith.constant dense<0.000000e+00> : vector<8x128xf32>
      %31 = vector.multi_reduction <add>, %30, %cst_12 [0] : vector<2x8x128xf32> to vector<8x128xf32>
      %32 = arith.addf %29, %31 : vector<8x128xf32>
      %c0_13 = arith.constant 0 : index
      %c0_14 = arith.constant 0 : index
      %33 = vector.load %arg4[%c0_13, %c0_14] : memref<8x128xf32, #tpu.memory_space<vmem>>, vector<8x128xf32>
      tpu.vector_store %arg4[%c0_13, %c0_14], %32 {strides = array<i32>} : memref<8x128xf32, #tpu.memory_space<vmem>>, vector<8x128xf32>,
      %c0_15 = arith.constant 0 : index
      %c0_16 = arith.constant 0 : index
      %34 = vector.load %arg5[%c0_15, %c0_16] : memref<8x128xf32, #tpu.memory_space<vmem>>, vector<8x128xf32>
      %35 = vector.shape_cast %28 : vector<16x128xf32> to vector<2x8x128xf32>
      %cst_17 = arith.constant dense<0.000000e+00> : vector<8x128xf32>
      %36 = vector.multi_reduction <add>, %35, %cst_17 [0] : vector<2x8x128xf32> to vector<8x128xf32>
      %37 = arith.addf %34, %36 : vector<8x128xf32>
      %c0_18 = arith.constant 0 : index
      %c0_19 = arith.constant 0 : index
      %38 = vector.load %arg5[%c0_18, %c0_19] : memref<8x128xf32, #tpu.memory_space<vmem>>, vector<8x128xf32>
      tpu.vector_store %arg5[%c0_18, %c0_19], %37 {strides = array<i32>} : memref<8x128xf32, #tpu.memory_space<vmem>>, vector<8x128xf32>,
    } else {
    }
    return
  }
  func.func @transform_0(%arg0: i32, %arg1: i32) -> (i32, i32) {
    %c1_i32 = arith.constant 1 : i32
    %0 = arith.muli %arg0, %c1_i32 : i32
    %1 = arith.addi %0, %arg1 : i32
    %c0_i32 = arith.constant 0 : i32
    %2 = arith.minsi %1, %c0_i32 : i32
    %c0_i32_0 = arith.constant 0 : i32
    %c0_i32_1 = arith.constant 0 : i32
    return %2, %c0_i32_0 : i32, i32
  }
  func.func @transform_1(%arg0: i32, %arg1: i32) -> (i32, i32) {
    %c1_i32 = arith.constant 1 : i32
    %0 = arith.muli %arg0, %c1_i32 : i32
    %1 = arith.addi %0, %arg1 : i32
    %c0_i32 = arith.constant 0 : i32
    %2 = arith.minsi %1, %c0_i32 : i32
    %c0_i32_0 = arith.constant 0 : i32
    %c0_i32_1 = arith.constant 0 : i32
    return %2, %c0_i32_0 : i32, i32
  }
  func.func @transform_2(%arg0: i32, %arg1: i32) -> (i32, i32) {
    %c0_i32 = arith.constant 0 : i32
    %c0_i32_0 = arith.constant 0 : i32
    return %arg0, %c0_i32 : i32, i32
  }
  func.func @transform_3(%arg0: i32, %arg1: i32) -> (i32, i32) {
    %c0_i32 = arith.constant 0 : i32
    %c0_i32_0 = arith.constant 0 : i32
    return %arg0, %c0_i32 : i32, i32
  }
}

</mosaic_0001>

<llo_original>
// kernel: tpu_custom_call.1
$region0: #{tpu_custom_call.1}
  #allocation0 [shape = 'u32[]', space=smem, size = 0x4, offset = 0x4, fixed_abs, tag = 'smem constant byte address 0x4 - core index']
  #allocation1 [shape = 'u32[144,128]{1,0:T(1,128)}', space=vmem, size = 0x12000, scoped, tag = 'internal scratch']
  %s0 = inlined_call_operand.hbm [shape: f32[16,128], index: 0, kind: input, shape index: {}]
  %s1 = inlined_call_operand.hbm [shape: f32[16,128], index: 1, kind: input, shape index: {}]
  %s2 = inlined_call_operand.hbm [shape: f32[16,128], index: 2, kind: output, shape index: {0}]
  %s3 = inlined_call_operand.hbm [shape: f32[16,128], index: 3, kind: output, shape index: {1}]
  %4 = xla_tuple %s2, %s3
  %s5 = sld [smem:[#allocation0]]
  $region69: #{tpu_custom_call.1} parent=0
    _
  %s7 = ssub.s32 1, %s5
  %s8 = scalar_select 0, %s7, %s5
  $region1: #{tpu_custom_call.1} parent=0
    #allocation2 [shape = 'u8[16384]{0}', space=vmem, size = 0x4000, scoped, tag = 'input window, operand 0']
    #allocation3 [shape = 's32[2]{0}', space=sflag, size = 0x8, scoped, tag = 'scoped memory for tpu_custom_call.1']
    #allocation4 [shape = 's32[2]{0}', space=sflag, size = 0x8, scoped, tag = 'scoped memory for tpu_custom_call.1']
    #allocation5 [shape = 'u8[16384]{0}', space=vmem, size = 0x4000, scoped, tag = 'input window, operand 1']
    #allocation6 [shape = 's32[2]{0}', space=sflag, size = 0x8, scoped, tag = 'scoped memory for tpu_custom_call.1']
    #allocation7 [shape = 'u8[8192]{0}', space=vmem, size = 0x2000, scoped, tag = 'output window, operand 0']
    #allocation8 [shape = 'u8[8192]{0}', space=vmem, size = 0x2000, scoped, tag = 'output window, operand 1']
    #allocation9 [shape = 's32[2]{0}', space=sflag, size = 0x8, scoped, tag = 'scoped memory for tpu_custom_call.1']
    %9 = vsyncpa [#allocation3], 0
    %s10 = scalar_lea.sflag [#allocation3], 1
    %11 = vsyncpa %s10, 0
    %12 = vsyncpa [#allocation6], 0
    %s13 = scalar_lea.sflag [#allocation6], 1
    %14 = vsyncpa %s13, 0
    %15 = vsyncpa [#allocation4], 0
    %s16 = scalar_lea.sflag [#allocation4], 1
    %17 = vsyncpa %s16, 0
    %18 = vsyncpa [#allocation9], 0
    %s19 = scalar_lea.sflag [#allocation9], 1
    %20 = vsyncpa %s19, 0
    loop: start=0, step=1, limit=4
    $region2: #{tpu_custom_call.1} parent=1 // loop_pre_header
      _
    $region3: #{tpu_custom_call.1} parent=1 // loop_header
      %s22 = sphi 0, %s26
      %p23 = scmp.ge.s32.totalorder %s22, 4
      %s29 = sphi 0, %s41
      %s30 = sphi 0, %s37
      %s31 = sphi 0, %s29
      %s32 = sphi 0, %s30
      %s33 = sphi 0, %s31
      %s34 = sphi 0, %s32
      %s50 = sphi 0, %s52
      %s53 = sphi 0, %s50
      %s54 = sphi 0, %s53
      %s70 = sphi 0, %s54
      %s82 = sphi 0, %s84
      %s85 = sphi 0, %s82
      %s86 = sphi 0, %s85
      %s102 = sphi 0, %s86
      %s108 = sphi 0, %s110
      %s111 = sphi 0, %s108
      %s112 = sphi 0, %s111
      %s128 = sphi 0, %s112
      %s134 = sphi 0, %s136
      %s137 = sphi 0, %s134
      %s138 = sphi 0, %s137
      %s154 = sphi 0, %s138
    $region4: #{tpu_custom_call.1} parent=1 // loop_header_branch
      %25 = sbr.rel (%p23) target = $region8
    $region5: #{tpu_custom_call.1} parent=1 // loop_body
      %s27 = ssub.s32 %s22, 1
      %s28 = ssub.s32 %s22, 2
      %s35 = sadd.s32 1, %s30
      %p36 = scmp.ge.s32.totalorder %s35, 1
      %s37 = scalar_select %p36, 0, %s35
      %s38 = sadd.s32 1, %s29
      %s39 = scalar_select %p36, %s38, %s29
      %p40 = scmp.ge.s32.totalorder %s39, 2
      %s41 = scalar_select %p40, 0, %s39
      %s42 = sadd.s32 %s29, %s30
      %p43 = scmp.lt.s32.totalorder %s42, 0
      %s44 = scalar_select %p43, %s42, 0
      %s45 = sadd.s32 %s41, %s37
      %p46 = scmp.lt.s32.totalorder %s45, 0
      %s47 = scalar_select %p46, %s45, 0
      %s48 = ssub.s32 %s44, %s47
      %p49 = scmp.eq.s32.totalorder %s48, 0
      %s51 = sadd.s32 %s50, 1
      %s52 = scalar_select %p49, %s50, %s51
      %p55 = pneg %p49
      %p56 = scmp.eq.s32.totalorder %s22, 1
      %p57 = por %p55, %p56
      %p58 = scmp.ne.s32.totalorder %s50, %s53
      %p59 = scmp.eq.s32.totalorder %s22, 0
      %p60 = por %p58, %p59
      %p61 = scmp.ne.s32.totalorder %s50, %s53
      %p62 = scmp.eq.s32.totalorder %s27, 1
      %p63 = por %p61, %p62
      %p64 = scmp.ne.s32.totalorder %s53, %s54
      %p65 = scmp.eq.s32.totalorder %s27, 0
      %p66 = por %p64, %p65
      %p67 = scmp.ne.s32.totalorder %s53, %s54
      %p68 = scmp.eq.s32.totalorder %s28, 1
      %p69 = por %p67, %p68
      %p71 = scmp.ne.s32.totalorder %s54, %s70
      %p72 = scmp.eq.s32.totalorder %s28, 0
      %p73 = por %p71, %p72
      %s74 = sadd.s32 %s29, %s30
      %p75 = scmp.lt.s32.totalorder %s74, 0
      %s76 = scalar_select %p75, %s74, 0
      %s77 = sadd.s32 %s41, %s37
      %p78 = scmp.lt.s32.totalorder %s77, 0
      %s79 = scalar_select %p78, %s77, 0
      %s80 = ssub.s32 %s76, %s79
      %p81 = scmp.eq.s32.totalorder %s80, 0
      %s83 = sadd.s32 %s82, 1
      %s84 = scalar_select %p81, %s82, %s83
      %p87 = pneg %p81
      %p88 = scmp.eq.s32.totalorder %s22, 1
      %p89 = por %p87, %p88
      %p90 = scmp.ne.s32.totalorder %s82, %s85
      %p91 = scmp.eq.s32.totalorder %s22, 0
      %p92 = por %p90, %p91
      %p93 = scmp.ne.s32.totalorder %s82, %s85
      %p94 = scmp.eq.s32.totalorder %s27, 1
      %p95 = por %p93, %p94
      %p96 = scmp.ne.s32.totalorder %s85, %s86
      %p97 = scmp.eq.s32.totalorder %s27, 0
      %p98 = por %p96, %p97
      %p99 = scmp.ne.s32.totalorder %s85, %s86
      %p100 = scmp.eq.s32.totalorder %s28, 1
      %p101 = por %p99, %p100
      %p103 = scmp.ne.s32.totalorder %s86, %s102
      %p104 = scmp.eq.s32.totalorder %s28, 0
      %p105 = por %p103, %p104
      %s106 = ssub.s32 %s29, %s41
      %p107 = scmp.eq.s32.totalorder %s106, 0
      %s109 = sadd.s32 %s108, 1
      %s110 = scalar_select %p107, %s108, %s109
      %p113 = pneg %p107
      %p114 = scmp.eq.s32.totalorder %s22, 1
      %p115 = por %p113, %p114
      %p116 = scmp.ne.s32.totalorder %s108, %s111
      %p117 = scmp.eq.s32.totalorder %s22, 0
      %p118 = por %p116, %p117
      %p119 = scmp.ne.s32.totalorder %s108, %s111
      %p120 = scmp.eq.s32.totalorder %s27, 1
      %p121 = por %p119, %p120
      %p122 = scmp.ne.s32.totalorder %s111, %s112
      %p123 = scmp.eq.s32.totalorder %s27, 0
      %p124 = por %p122, %p123
      %p125 = scmp.ne.s32.totalorder %s111, %s112
      %p126 = scmp.eq.s32.totalorder %s28, 1
      %p127 = por %p125, %p126
      %p129 = scmp.ne.s32.totalorder %s112, %s128
      %p130 = scmp.eq.s32.totalorder %s28, 0
      %p131 = por %p129, %p130
      %s132 = ssub.s32 %s29, %s41
      %p133 = scmp.eq.s32.totalorder %s132, 0
      %s135 = sadd.s32 %s134, 1
      %s136 = scalar_select %p133, %s134, %s135
      %p139 = pneg %p133
      %p140 = scmp.eq.s32.totalorder %s22, 1
      %p141 = por %p139, %p140
      %p142 = scmp.ne.s32.totalorder %s134, %s137
      %p143 = scmp.eq.s32.totalorder %s22, 0
      %p144 = por %p142, %p143
      %p145 = scmp.ne.s32.totalorder %s134, %s137
      %p146 = scmp.eq.s32.totalorder %s27, 1
      %p147 = por %p145, %p146
      %p148 = scmp.ne.s32.totalorder %s137, %s138
      %p149 = scmp.eq.s32.totalorder %s27, 0
      %p150 = por %p148, %p149
      %p151 = scmp.ne.s32.totalorder %s137, %s138
      %p152 = scmp.eq.s32.totalorder %s28, 1
      %p153 = por %p151, %p152
      %p155 = scmp.ne.s32.totalorder %s138, %s154
      %p156 = scmp.eq.s32.totalorder %s28, 0
      %p157 = por %p155, %p156
      %p158 = scmp.le.s32.totalorder 1, %s22
      %p159 = scmp.lt.s32.totalorder %s22, 3
      %p160 = pnand %p158, %p159
      %p161 = pneg %p160
      // Predicated region
      $region9: #{tpu_custom_call.1} parent=5 // pred_check
        _
      $region10: #{tpu_custom_call.1} parent=5 // pred_check_branch
        %163 = sbr.rel (%p160) target = $region12
      $region11: #{tpu_custom_call.1} parent=5 // pred_region
        %s164 = ssub.s32 %s22, 1
      $region12: #{tpu_custom_call.1} parent=5 // pred_fallthru
        _
      %p165 = scmp.lt.s32.totalorder %s22, 2
      // Predicated region
      $region13: #{tpu_custom_call.1} parent=5 // pred_check
        %p166 = pneg %p165
      $region14: #{tpu_custom_call.1} parent=5 // pred_check_branch
        %168 = sbr.rel (%p166) target = $region16
      $region15: #{tpu_custom_call.1} parent=5 // pred_region
        // Predicated region
        $region17: #{tpu_custom_call.1} parent=15 // pred_check
          %p169 = pneg %p60
        $region18: #{tpu_custom_call.1} parent=15 // pred_check_branch
          %171 = sbr.rel (%p169) target = $region20
        $region19: #{tpu_custom_call.1} parent=15 // pred_region
          %s172 = sand.u32 %s50, 1
          %s173 = scalar_lea.sflag [#allocation3], %s172
          %s174 = sand.u32 %s50, 1
          %s175 = smul.addr %s174, 16
          %s176 = scalar_lea.vmem [#allocation2], %s175
          %s177 = sadd.s32 %s29, %s30
          %p178 = scmp.lt.s32.totalorder %s177, 0
          %s179 = scalar_select %p178, %s177, 0
          %s180 = smul.u32 2, %s179
          %s182 = ssub.s32 256, 256
          %183 = vsyncadd %s173, %s182
          %s184 = smul.addr %s180, 128
          %s185 = scalar_lea.hbm %s0, %s184
          %s186 = sshll.u32 %s176, 4
          %s187 = int_to_ptr.vmem [resolvable:$true] %s186
          %192 = dma.hbm_to_vmem [thread:$0]  %s185, 256, %s187, %s173, 128, 128, 8
        $region20: #{tpu_custom_call.1} parent=15 // pred_fallthru
          _
        // Predicated region
        $region21: #{tpu_custom_call.1} parent=15 // pred_check
          %p193 = pneg %p92
        $region22: #{tpu_custom_call.1} parent=15 // pred_check_branch
          %195 = sbr.rel (%p193) target = $region24
        $region23: #{tpu_custom_call.1} parent=15 // pred_region
          %s196 = sand.u32 %s82, 1
          %s197 = scalar_lea.sflag [#allocation6], %s196
          %s198 = sand.u32 %s82, 1
          %s199 = smul.addr %s198, 16
          %s200 = scalar_lea.vmem [#allocation5], %s199
          %s201 = sadd.s32 %s29, %s30
          %p202 = scmp.lt.s32.totalorder %s201, 0
          %s203 = scalar_select %p202, %s201, 0
          %s204 = smul.u32 2, %s203
          %s206 = ssub.s32 256, 256
          %207 = vsyncadd %s197, %s206
          %s208 = smul.addr %s204, 128
          %s209 = scalar_lea.hbm %s1, %s208
          %s210 = sshll.u32 %s200, 4
          %s211 = int_to_ptr.vmem [resolvable:$true] %s210
          %216 = dma.hbm_to_vmem [thread:$0]  %s209, 256, %s211, %s197, 128, 128, 8
        $region24: #{tpu_custom_call.1} parent=15 // pred_fallthru
          _
      $region16: #{tpu_custom_call.1} parent=5 // pred_fallthru
        _
      %p217 = scmp.le.s32.totalorder 1, %s22
      %p218 = scmp.lt.s32.totalorder %s22, 3
      %p219 = pnand %p217, %p218
      %p220 = pneg %p219
      // Predicated region
      $region25: #{tpu_custom_call.1} parent=5 // pred_check
        _
      $region26: #{tpu_custom_call.1} parent=5 // pred_check_branch
        %222 = sbr.rel (%p219) target = $region28
      $region27: #{tpu_custom_call.1} parent=5 // pred_region
        %s223 = ssub.s32 %s22, 1
        %s224 = sand.u32 %s53, 1
        %s225 = scalar_lea.sflag [#allocation3], %s224
        %s226 = sand.u32 %s53, 1
        %s227 = smul.addr %s226, 16
        %s228 = scalar_lea.vmem [#allocation2], %s227
        // Predicated region
        $region29: #{tpu_custom_call.1} parent=27 // pred_check
          %p229 = pneg %p66
        $region30: #{tpu_custom_call.1} parent=27 // pred_check_branch
          %231 = sbr.rel (%p229) target = $region32
        $region31: #{tpu_custom_call.1} parent=27 // pred_region
          %232 = dma.done %s225, 256
        $region32: #{tpu_custom_call.1} parent=27 // pred_fallthru
          _
        %s233 = sand.u32 %s85, 1
        %s234 = scalar_lea.sflag [#allocation6], %s233
        %s235 = sand.u32 %s85, 1
        %s236 = smul.addr %s235, 16
        %s237 = scalar_lea.vmem [#allocation5], %s236
        // Predicated region
        $region33: #{tpu_custom_call.1} parent=27 // pred_check
          %p238 = pneg %p98
        $region34: #{tpu_custom_call.1} parent=27 // pred_check_branch
          %240 = sbr.rel (%p238) target = $region36
        $region35: #{tpu_custom_call.1} parent=27 // pred_region
          %241 = dma.done %s234, 256
        $region36: #{tpu_custom_call.1} parent=27 // pred_fallthru
          _
        %s242 = sand.u32 %s53, 1
        %s243 = scalar_lea.sflag [#allocation3], %s242
        %s244 = sand.u32 %s53, 1
        %s245 = smul.addr %s244, 16
        %s246 = scalar_lea.vmem [#allocation2], %s245
        %p247 = pneg %p66
        %p248 = pneg %p63
        %s249 = sand.u32 %s85, 1
        %s250 = scalar_lea.sflag [#allocation6], %s249
        %s251 = sand.u32 %s85, 1
        %s252 = smul.addr %s251, 16
        %s253 = scalar_lea.vmem [#allocation5], %s252
        %p254 = pneg %p98
        %p255 = pneg %p95
        %p256 = pneg %p124
        %p257 = pneg %p121
        %s258 = sand.u32 %s111, 1
        %s259 = scalar_lea.sflag [#allocation4], %s258
        %s260 = sand.u32 %s111, 1
        %s261 = smul.addr %s260, 8
        %s262 = scalar_lea.vmem [#allocation7], %s261
        %p263 = pneg %p150
        %p264 = pneg %p147
        %s265 = sand.u32 %s137, 1
        %s266 = scalar_lea.sflag [#allocation9], %s265
        %s267 = sand.u32 %s137, 1
        %s268 = smul.addr %s267, 8
        %s269 = scalar_lea.vmem [#allocation8], %s268
        %s270 = sadd.s32 %s31, %s32
        %p271 = scmp.lt.s32.totalorder %s270, 0
        %s272 = scalar_select %p271, %s270, 0
        %s273 = smul.u32 2, %s272
        %s274 = sadd.s32 %s31, %s32
        %p275 = scmp.lt.s32.totalorder %s274, 0
        %s276 = scalar_select %p275, %s274, 0
        %s277 = smul.u32 2, %s276
        %p278 = scmp.eq.s32.totalorder %s32, 0
        // Predicated region
        $region37: #{tpu_custom_call.1} parent=27 // pred_check
          %p279 = pneg %p278
        $region38: #{tpu_custom_call.1} parent=27 // pred_check_branch
          %281 = sbr.rel (%p279) target = $region40
        $region39: #{tpu_custom_call.1} parent=27 // pred_region
          %282 = vst [vmem:[%s262] sm:$0xff] 0.0
          %283 = vst [vmem:[%s269] sm:$0xff] 0.0
        $region40: #{tpu_custom_call.1} parent=27 // pred_fallthru
          _
        %s284 = sadd.s32 %s31, %s32
        %s285 = smul.u32 %s284, 16
        %v286 = vld [vmem:[%s228] sm:$0xff]
        %v287 = vld [vmem:[%s228 + $0x8] sm:$0xff]
        %v288 = vld [vmem:[%s237] sm:$0xff]
        %v289 = vld [vmem:[%s237 + $0x8] sm:$0xff]
        %s290 = sadd.s32 %s285, 16
        %p291 = scmp.le.s32.totalorder %s290, 16
        // Predicated region
        $region41: #{tpu_custom_call.1} parent=27 // pred_check
          %p292 = pneg %p291
        $region42: #{tpu_custom_call.1} parent=27 // pred_check_branch
          %294 = sbr.rel (%p292) target = $region44
        $region43: #{tpu_custom_call.1} parent=27 // pred_region
          %vm295 = vcmp.gt.f32.partialorder %v286, 0.0
          %vm296 = vcmp.gt.f32.partialorder %v287, 0.0
          %vm297 = vcmp.eq.f32.partialorder %v288, 1.0
          %vm298 = vcmp.eq.f32.partialorder %v289, 1.0
          %vm299 = vmand %vm297, %vm295
          %vm300 = vmand %vm298, %vm296
          %v301 = vsel %vm299, 1, 0
          %v302 = vsel %vm300, 1, 0
          %v303 = vcvt.s32.f32 %v301
          %v304 = vcvt.s32.f32 %v302
          %v305 = vsel %vm295, 1, 0
          %v306 = vsel %vm296, 1, 0
          %v307 = vcvt.s32.f32 %v305
          %v308 = vcvt.s32.f32 %v306
          %v309 = vld [vmem:[%s262] sm:$0xff]
          %v310 = vadd.f32 %v303, %v304
          %v311 = vadd.f32 %v309, %v310
          %312 = vst [vmem:[%s262] sm:$0xff] %v311
          %v313 = vld [vmem:[%s269] sm:$0xff]
          %v314 = vadd.f32 %v307, %v308
          %v315 = vadd.f32 %v313, %v314
          %316 = vst [vmem:[%s269] sm:$0xff] %v315
        $region44: #{tpu_custom_call.1} parent=27 // pred_fallthru
          _
        %p317 = scmp.gt.s32.totalorder %s290, 16
        // Predicated region
        $region45: #{tpu_custom_call.1} parent=27 // pred_check
          %p318 = pneg %p317
        $region46: #{tpu_custom_call.1} parent=27 // pred_check_branch
          %320 = sbr.rel (%p318) target = $region48
        $region47: #{tpu_custom_call.1} parent=27 // pred_region
          %v321 = vlaneseq
          %v322 = vshrl.u32 %v321, 7
          %v323 = vadd.s32 %v322, 8
          %s324 = ssub.s32 16, %s285
          %v325 = vstv %s324
          %vm326 = vcmp.lt.s32.totalorder %v322, %v325
          %vm327 = vcmp.lt.s32.totalorder %v323, %v325
          %vm328 = vcmp.gt.f32.partialorder %v286, 0.0
          %vm329 = vcmp.gt.f32.partialorder %v287, 0.0
          %vm330 = vmand %vm328, %vm326
          %vm331 = vmand %vm329, %vm327
          %vm332 = vcmp.eq.f32.partialorder %v288, 1.0
          %vm333 = vcmp.eq.f32.partialorder %v289, 1.0
          %vm334 = vmand %vm332, %vm330
          %vm335 = vmand %vm333, %vm331
          %v336 = vsel %vm334, 1, 0
          %v337 = vsel %vm335, 1, 0
          %v338 = vcvt.s32.f32 %v336
          %v339 = vcvt.s32.f32 %v337
          %v340 = vsel %vm330, 1, 0
          %v341 = vsel %vm331, 1, 0
          %v342 = vcvt.s32.f32 %v340
          %v343 = vcvt.s32.f32 %v341
          %v344 = vld [vmem:[%s262] sm:$0xff]
          %v345 = vadd.f32 %v338, %v339
          %v346 = vadd.f32 %v344, %v345
          %347 = vst [vmem:[%s262] sm:$0xff] %v346
          %v348 = vld [vmem:[%s269] sm:$0xff]
          %v349 = vadd.f32 %v342, %v343
          %v350 = vadd.f32 %v348, %v349
          %351 = vst [vmem:[%s269] sm:$0xff] %v350
        $region48: #{tpu_custom_call.1} parent=27 // pred_fallthru
          _
        %s352 = sand.u32 %s111, 1
        %s353 = scalar_lea.sflag [#allocation4], %s352
        %s354 = sand.u32 %s111, 1
        %s355 = smul.addr %s354, 8
        %s356 = scalar_lea.vmem [#allocation7], %s355
        %s357 = sand.u32 %s137, 1
        %s358 = scalar_lea.sflag [#allocation9], %s357
        %s359 = sand.u32 %s137, 1
        %s360 = smul.addr %s359, 8
        %s361 = scalar_lea.vmem [#allocation8], %s360
        // Predicated region
        $region49: #{tpu_custom_call.1} parent=27 // pred_check
          %p362 = pneg %p121
        $region50: #{tpu_custom_call.1} parent=27 // pred_check_branch
          %364 = sbr.rel (%p362) target = $region52
        $region51: #{tpu_custom_call.1} parent=27 // pred_region
          %s366 = ssub.s32 128, 128
          %367 = vsyncadd %s353, %s366
          %s368 = smul.addr %s31, 128
          %s369 = scalar_lea.hbm %s2, %s368
          %s371 = sshll.u32 %s356, 4
          %s372 = int_to_ptr.vmem [resolvable:$true] %s371
          %374 = dma.vmem_to_hbm [thread:$0]  %s372, 128, %s369, %s353
        $region52: #{tpu_custom_call.1} parent=27 // pred_fallthru
          _
        // Predicated region
        $region53: #{tpu_custom_call.1} parent=27 // pred_check
          %p375 = pneg %p147
        $region54: #{tpu_custom_call.1} parent=27 // pred_check_branch
          %377 = sbr.rel (%p375) target = $region56
        $region55: #{tpu_custom_call.1} parent=27 // pred_region
          %s379 = ssub.s32 128, 128
          %380 = vsyncadd %s358, %s379
          %s381 = smul.addr %s31, 128
          %s382 = scalar_lea.hbm %s3, %s381
          %s384 = sshll.u32 %s361, 4
          %s385 = int_to_ptr.vmem [resolvable:$true] %s384
          %387 = dma.vmem_to_hbm [thread:$0]  %s385, 128, %s382, %s358
        $region56: #{tpu_custom_call.1} parent=27 // pred_fallthru
          _
      $region28: #{tpu_custom_call.1} parent=5 // pred_fallthru
        _
      %p388 = scmp.le.s32.totalorder 2, %s22
      // Predicated region
      $region57: #{tpu_custom_call.1} parent=5 // pred_check
        %p389 = pneg %p388
      $region58: #{tpu_custom_call.1} parent=5 // pred_check_branch
        %391 = sbr.rel (%p389) target = $region60
      $region59: #{tpu_custom_call.1} parent=5 // pred_region
        %s392 = ssub.s32 %s22, 2
        // Predicated region
        $region61: #{tpu_custom_call.1} parent=59 // pred_check
          %p393 = pneg %p127
        $region62: #{tpu_custom_call.1} parent=59 // pred_check_branch
          %395 = sbr.rel (%p393) target = $region64
        $region63: #{tpu_custom_call.1} parent=59 // pred_region
          %s396 = sand.u32 %s112, 1
          %s397 = scalar_lea.sflag [#allocation4], %s396
          %s398 = sand.u32 %s112, 1
          %s399 = smul.addr %s398, 8
          %s400 = scalar_lea.vmem [#allocation7], %s399
          %401 = dma.done %s397, 128
        $region64: #{tpu_custom_call.1} parent=59 // pred_fallthru
          _
        // Predicated region
        $region65: #{tpu_custom_call.1} parent=59 // pred_check
          %p402 = pneg %p153
        $region66: #{tpu_custom_call.1} parent=59 // pred_check_branch
          %404 = sbr.rel (%p402) target = $region68
        $region67: #{tpu_custom_call.1} parent=59 // pred_region
          %s405 = sand.u32 %s138, 1
          %s406 = scalar_lea.sflag [#allocation9], %s405
          %s407 = sand.u32 %s138, 1
          %s408 = smul.addr %s407, 8
          %s409 = scalar_lea.vmem [#allocation8], %s408
          %410 = dma.done %s406, 128
        $region68: #{tpu_custom_call.1} parent=59 // pred_fallthru
          _
      $region60: #{tpu_custom_call.1} parent=5 // pred_fallthru
        _
    $region6: #{tpu_custom_call.1} parent=1 // loop_footer
      %s26 = sadd.s32 1, %s22
    $region7: #{tpu_custom_call.1} parent=1 // loop_footer_branch
      %21 = sbr.rel target = $region3
    $region8: #{tpu_custom_call.1} parent=1 // loop_exit
      _
    %411 = vsyncpa [#allocation3], 1
    %s412 = scalar_lea.sflag [#allocation3], 1
    %413 = vsyncpa %s412, 1
    %414 = vsyncpa [#allocation6], 1
    %s415 = scalar_lea.sflag [#allocation6], 1
    %416 = vsyncpa %s415, 1
    %417 = vsyncpa [#allocation4], 1
    %s418 = scalar_lea.sflag [#allocation4], 1
    %419 = vsyncpa %s418, 1
    %420 = vsyncpa [#allocation9], 1
    %s421 = scalar_lea.sflag [#allocation9], 1
    %422 = vsyncpa %s421, 1

</llo_original>
